<compile_context>
chip_gen: v5e
topology: v5e:2x2
jax: 0.10.0
libtpu: 0.0.40
codegen_flags: <defaults>
</compile_context>

<pallas_src>
import math

import jax
import jax.numpy as jnp
from jax.experimental import pallas as pl
from jax.experimental.pallas import tpu as pltpu

BN_EPS = 1e-5
LANE = 128


def _align8(r):
    return ((r + 7) // 8) * 8


def _make_kernel(layout):
    """Fused MLP kernel: L x (Linear -> BN(train) -> ReLU) + out Linear."""
    L = layout["num_hidden"]
    D = layout["d"]
    P = layout["p"]
    w0_row = layout["w0_row"]
    wl_rows = layout["wl_rows"]
    g_rows = layout["gamma_rows"]
    b_rows = layout["beta_rows"]
    wout_row = layout["wout_row"]
    bout_row = layout["bout_row"]

    def kernel(x_ref, p_ref, out_ref):
        x = x_ref[...].astype(jnp.float32)                         # (N, D)
        n = x.shape[0]
        # Column-mean operator, hoisted once: batch stats go through the MXU
        # ((1,N)@(N,P)) instead of XLU cross-sublane reductions.
        ones_row = jnp.full((1, n), 1.0 / n, dtype=jnp.float32)

        def bn_relu(h, l):
            gamma = p_ref[g_rows[l]:g_rows[l] + 1, :]              # (1, P)
            beta = p_ref[b_rows[l]:b_rows[l] + 1, :]               # (1, P)
            # Two-pass batch statistics (numerically stable), biased variance.
            mean = jnp.dot(ones_row, h, preferred_element_type=jnp.float32)
            c = h - mean
            var = jnp.dot(ones_row, c * c, preferred_element_type=jnp.float32)
            scale = gamma * jax.lax.rsqrt(var + BN_EPS)            # (1, P)
            shift = beta - mean * scale                            # (1, P)
            return jnp.maximum(h * scale + shift, 0.0)             # BN + ReLU

        # Layer 0: (N, D) @ (D, P)   (hidden bias dropped: cancelled by BN mean)
        w0 = p_ref[w0_row:w0_row + D, :]
        h = jnp.dot(x, w0, preferred_element_type=jnp.float32)     # (N, P)
        h = bn_relu(h, 0)
        # Layers 1..L-1: (N, P) @ (P, P), statically unrolled.
        for l in range(1, L):
            r = wl_rows[l - 1]
            w = p_ref[r:r + P, :]
            h = jnp.dot(h, w, preferred_element_type=jnp.float32)
            h = bn_relu(h, l)
        # Output layer (lane-dense, padded to P lanes).
        w_out = p_ref[wout_row:wout_row + P, :]
        b_out = p_ref[bout_row:bout_row + 1, :]
        y = jnp.dot(h, w_out, preferred_element_type=jnp.float32) + b_out
        out_ref[...] = y.astype(out_ref.dtype)

    return kernel


def prepare_params(params):
    """One-time packing of all static parameters into a single (R, P) f32 buffer.

    Row layout (each section start aligned to 8 sublanes):
      [w0_row, w0_row+D)        : layer-0 weight, cols [0, D)
      [wl_rows[i], +P) per i    : layer-(i+1) weight embedded in a PxP block
      gamma_rows[l], beta_rows[l]: one row each, cols [0, D)
      [wout_row, wout_row+P)    : out-layer weight, cols [0, C)
      bout_row                  : out-layer bias, cols [0, C)
    Padded lanes/rows are zero, which keeps padded activation columns exactly 0.
    """
    hidden, (w_out, b_out) = params["hidden"], params["out"]
    L = len(hidden)
    assert L >= 1, "at least one hidden layer expected"
    D = hidden[0][0].shape[0]
    for (w, _b, _g, _bt) in hidden:
        assert w.shape == (D, D), "module requires equal consecutive hidden dims"
    C = w_out.shape[1]
    P = LANE * max(pl.cdiv(D, LANE), pl.cdiv(C, LANE))  # common padded lane width

    r = 0
    w0_row = r; r = _align8(r + D)
    wl_rows = []
    for _ in range(1, L):
        wl_rows.append(r); r = _align8(r + P)
    gamma_rows, beta_rows = [], []
    for _ in range(L):
        gamma_rows.append(r); r += 1
    for _ in range(L):
        beta_rows.append(r); r += 1
    r = _align8(r)
    wout_row = r; r = _align8(r + P)
    bout_row = r; r += 1
    R = _align8(r)

    buf = jnp.zeros((R, P), jnp.float32)
    buf = buf.at[w0_row:w0_row + D, :D].set(hidden[0][0])
    for i, l in enumerate(range(1, L)):
        buf = buf.at[wl_rows[i]:wl_rows[i] + D, :D].set(hidden[l][0])
    for l in range(L):
        buf = buf.at[gamma_rows[l], :D].set(hidden[l][2].reshape(-1))
        buf = buf.at[beta_rows[l], :D].set(hidden[l][3].reshape(-1))
    buf = buf.at[wout_row:wout_row + D, :C].set(w_out)
    buf = buf.at[bout_row, :C].set(b_out.reshape(-1))

    layout = dict(num_hidden=L, d=D, c=C, p=P, rows=R,
                  w0_row=w0_row, wl_rows=tuple(wl_rows),
                  gamma_rows=tuple(gamma_rows), beta_rows=tuple(beta_rows),
                  wout_row=wout_row, bout_row=bout_row)
    return buf, layout


def make_forward(layout, n):
    """Build a jitted forward(x, packed) -> (n, num_classes) logits."""
    D, C, P, R = layout["d"], layout["c"], layout["p"], layout["rows"]

    # Whole batch in one block (train-mode BN needs full-batch statistics);
    # params buffer resident in VMEM (~R*P*4 bytes, trivial at these sizes).
    call = pl.pallas_call(
        _make_kernel(layout),
        out_shape=jax.ShapeDtypeStruct((n, P), jnp.float32),
        grid_spec=pltpu.PrefetchScalarGridSpec(
            num_scalar_prefetch=0,
            grid=(1,),
            in_specs=[
                pl.BlockSpec((n, D), lambda i: (0, 0)),   # x
                pl.BlockSpec((R, P), lambda i: (0, 0)),   # packed parameters
            ],
            out_specs=pl.BlockSpec((n, P), lambda i: (0, 0)),
        ),
        compiler_params=pltpu.CompilerParams(
            dimension_semantics=("arbitrary",)),
    )

    @jax.jit
    def forward(x, packed):
        out_padded = call(x, packed)          # (n, P), lane-dense stores
        return out_padded[:, :C]              # fused under the same jit

    return forward


def init_params(key, hidden_dims, num_classes):
    """Deterministic params mirroring the module's __init__ shapes.

    Linear: PyTorch default U(-1/sqrt(fan_in), 1/sqrt(fan_in)) for W and b.
    BatchNorm1d: default gamma=1, beta=0.
    Weights stored as (in, out) (already transposed for x @ W).
    Hidden-layer biases are kept here (reference fidelity) but are NOT packed
    for the kernel: train-mode BN cancels them exactly.
    """
    hidden = []
    for i in range(len(hidden_dims) - 1):
        d_in, d_out = hidden_dims[i], hidden_dims[i + 1]
        key, kw, kb = jax.random.split(key, 3)
        bound = 1.0 / math.sqrt(d_in)
        w = jax.random.uniform(kw, (d_in, d_out), jnp.float32, -bound, bound)
        b = jax.random.uniform(kb, (1, d_out), jnp.float32, -bound, bound)
        gamma = jnp.ones((1, d_out), jnp.float32)
        beta = jnp.zeros((1, d_out), jnp.float32)
        hidden.append((w, b, gamma, beta))
    d_last = hidden_dims[-1]
    key, kw, kb = jax.random.split(key, 3)
    bound = 1.0 / math.sqrt(d_last)
    w_out = jax.random.uniform(kw, (d_last, num_classes), jnp.float32, -bound, bound)
    b_out = jax.random.uniform(kb, (1, num_classes), jnp.float32, -bound, bound)
    return {"hidden": hidden, "out": (w_out, b_out)}


def reference_forward(x, params):
    """Plain-JAX reference mirroring the PyTorch forward (train-mode BN, with biases)."""
    h = x.astype(jnp.float32)
    for (w, b, gamma, beta) in params["hidden"]:
        h = h @ w + b
        mean = jnp.mean(h, axis=0, keepdims=True)
        var = jnp.mean((h - mean) ** 2, axis=0, keepdims=True)
        h = (h - mean) / jnp.sqrt(var + BN_EPS) * gamma + beta
        h = jnp.maximum(h, 0.0)
    w_out, b_out = params["out"]
    return h @ w_out + b_out


if __name__ == "__main__":
    # Consecutive hidden dims must be equal for the module's
    # BatchNorm1d(num_features=hidden_dims[i]) to be shape-compatible with the
    # hidden_dims[i+1]-dim activation it receives.
    hidden_dims = [32, 32, 32]
    num_classes = 10
    batch = 8  # > 1 (train-mode BN with batch 1 is degenerate; PyTorch errors)

    key = jax.random.PRNGKey(0)
    key, kx = jax.random.split(key)
    x = jax.random.normal(kx, (batch, hidden_dims[0]), jnp.float32)
    params = init_params(key, hidden_dims, num_classes)

    # One-time prepare (hoisted out of the per-call forward path).
    packed, layout = prepare_params(params)
    packed = jax.block_until_ready(packed)
    forward = make_forward(layout, batch)

    out = forward(x, packed)
    out = jax.block_until_ready(out)

    ref = reference_forward(x, params)
    assert out.shape == (batch, num_classes)
    assert jnp.allclose(out, ref, atol=1e-4, rtol=1e-4), float(jnp.max(jnp.abs(out - ref)))
    print("KERNEL_OK")
</pallas_src>

<mosaic_0001>
module attributes {stable_mosaic.version = 11 : i64} {
  func.func @kernel(%arg0: i32, %arg1: memref<8x32xf32, #tpu.memory_space<vmem>>, %arg2: memref<304x128xf32, #tpu.memory_space<vmem>>, %arg3: memref<8x128xf32, #tpu.memory_space<vmem>>) attributes {dimension_semantics = [#tpu.dimension_semantics<arbitrary>], iteration_bounds = array<i64: 1>, scalar_prefetch = 0 : i64, scratch_operands = 0 : i64, tpu.core_type = #tpu.core_type<tc>, window_params = [{pipeline_mode = #tpu.pipeline_mode<synchronous>, transform_indices = @transform_0, window_bounds = array<i64: 8, 32>}, {pipeline_mode = #tpu.pipeline_mode<synchronous>, transform_indices = @transform_1, window_bounds = array<i64: 304, 128>}, {pipeline_mode = #tpu.pipeline_mode<synchronous>, transform_indices = @transform_2, window_bounds = array<i64: 8, 128>}]} {
    %c0 = arith.constant 0 : index
    %c0_0 = arith.constant 0 : index
    %0 = vector.load %arg1[%c0, %c0_0] : memref<8x32xf32, #tpu.memory_space<vmem>>, vector<8x32xf32>
    %cst = arith.constant 1.250000e-01 : f32
    %1 = vector.broadcast %cst : f32 to vector<1x8xf32>
    %c0_1 = arith.constant 0 : index
    %c0_2 = arith.constant 0 : index
    %2 = vector.load %arg2[%c0_1, %c0_2] : memref<304x128xf32, #tpu.memory_space<vmem>>, vector<32x128xf32>
    %cst_3 = arith.constant dense<0.000000e+00> : vector<8x128xf32>
    %3 = tpu.matmul %0, %2, %cst_3 {dimension_numbers = #tpu.dot_dimension_numbers<[1], [0], [0], [1], [0, 0, 1, 1], [], []>} : vector<8x32xf32>, vector<32x128xf32>, vector<8x128xf32> -> vector<8x128xf32>
    %c160 = arith.constant 160 : index
    %c0_4 = arith.constant 0 : index
    %4 = vector.load %arg2[%c160, %c0_4] : memref<304x128xf32, #tpu.memory_space<vmem>>, vector<1x128xf32>
    %c162 = arith.constant 162 : index
    %c0_5 = arith.constant 0 : index
    %5 = vector.load %arg2[%c162, %c0_5] : memref<304x128xf32, #tpu.memory_space<vmem>>, vector<1x128xf32>
    %cst_6 = arith.constant dense<0.000000e+00> : vector<1x128xf32>
    %6 = tpu.matmul %1, %3, %cst_6 {dimension_numbers = #tpu.dot_dimension_numbers<[1], [0], [0], [1], [0, 0, 1, 1], [], []>} : vector<1x8xf32>, vector<8x128xf32>, vector<1x128xf32> -> vector<1x128xf32>
    %7 = vector.broadcast %6 : vector<1x128xf32> to vector<8x128xf32>
    %8 = arith.subf %3, %7 : vector<8x128xf32>
    %9 = arith.mulf %8, %8 : vector<8x128xf32>
    %cst_7 = arith.constant dense<0.000000e+00> : vector<1x128xf32>
    %10 = tpu.matmul %1, %9, %cst_7 {dimension_numbers = #tpu.dot_dimension_numbers<[1], [0], [0], [1], [0, 0, 1, 1], [], []>} : vector<1x8xf32>, vector<8x128xf32>, vector<1x128xf32> -> vector<1x128xf32>
    %cst_8 = arith.constant 9.99999974E-6 : f32
    %11 = vector.broadcast %cst_8 : f32 to vector<1x128xf32>
    %12 = arith.addf %10, %11 : vector<1x128xf32>
    %13 = math.rsqrt %12 : vector<1x128xf32>
    %14 = arith.mulf %4, %13 : vector<1x128xf32>
    %15 = arith.mulf %6, %14 : vector<1x128xf32>
    %16 = arith.subf %5, %15 : vector<1x128xf32>
    %17 = vector.broadcast %14 : vector<1x128xf32> to vector<8x128xf32>
    %18 = arith.mulf %3, %17 : vector<8x128xf32>
    %19 = vector.broadcast %16 : vector<1x128xf32> to vector<8x128xf32>
    %20 = arith.addf %18, %19 : vector<8x128xf32>
    %cst_9 = arith.constant 0.000000e+00 : f32
    %21 = vector.broadcast %cst_9 : f32 to vector<8x128xf32>
    %22 = arith.maximumf %20, %21 : vector<8x128xf32>
    %c32 = arith.constant 32 : index
    %c0_10 = arith.constant 0 : index
    %23 = vector.load %arg2[%c32, %c0_10] : memref<304x128xf32, #tpu.memory_space<vmem>>, vector<128x128xf32>
    %cst_11 = arith.constant dense<0.000000e+00> : vector<8x128xf32>
    %24 = tpu.matmul %22, %23, %cst_11 {dimension_numbers = #tpu.dot_dimension_numbers<[1], [0], [0], [1], [0, 0, 1, 1], [], []>} : vector<8x128xf32>, vector<128x128xf32>, vector<8x128xf32> -> vector<8x128xf32>
    %c161 = arith.constant 161 : index
    %c0_12 = arith.constant 0 : index
    %25 = vector.load %arg2[%c161, %c0_12] : memref<304x128xf32, #tpu.memory_space<vmem>>, vector<1x128xf32>
    %c163 = arith.constant 163 : index
    %c0_13 = arith.constant 0 : index
    %26 = vector.load %arg2[%c163, %c0_13] : memref<304x128xf32, #tpu.memory_space<vmem>>, vector<1x128xf32>
    %cst_14 = arith.constant dense<0.000000e+00> : vector<1x128xf32>
    %27 = tpu.matmul %1, %24, %cst_14 {dimension_numbers = #tpu.dot_dimension_numbers<[1], [0], [0], [1], [0, 0, 1, 1], [], []>} : vector<1x8xf32>, vector<8x128xf32>, vector<1x128xf32> -> vector<1x128xf32>
    %28 = vector.broadcast %27 : vector<1x128xf32> to vector<8x128xf32>
    %29 = arith.subf %24, %28 : vector<8x128xf32>
    %30 = arith.mulf %29, %29 : vector<8x128xf32>
    %cst_15 = arith.constant dense<0.000000e+00> : vector<1x128xf32>
    %31 = tpu.matmul %1, %30, %cst_15 {dimension_numbers = #tpu.dot_dimension_numbers<[1], [0], [0], [1], [0, 0, 1, 1], [], []>} : vector<1x8xf32>, vector<8x128xf32>, vector<1x128xf32> -> vector<1x128xf32>
    %cst_16 = arith.constant 9.99999974E-6 : f32
    %32 = vector.broadcast %cst_16 : f32 to vector<1x128xf32>
    %33 = arith.addf %31, %32 : vector<1x128xf32>
    %34 = math.rsqrt %33 : vector<1x128xf32>
    %35 = arith.mulf %25, %34 : vector<1x128xf32>
    %36 = arith.mulf %27, %35 : vector<1x128xf32>
    %37 = arith.subf %26, %36 : vector<1x128xf32>
    %38 = vector.broadcast %35 : vector<1x128xf32> to vector<8x128xf32>
    %39 = arith.mulf %24, %38 : vector<8x128xf32>
    %40 = vector.broadcast %37 : vector<1x128xf32> to vector<8x128xf32>
    %41 = arith.addf %39, %40 : vector<8x128xf32>
    %cst_17 = arith.constant 0.000000e+00 : f32
    %42 = vector.broadcast %cst_17 : f32 to vector<8x128xf32>
    %43 = arith.maximumf %41, %42 : vector<8x128xf32>
    %c168 = arith.constant 168 : index
    %c0_18 = arith.constant 0 : index
    %44 = vector.load %arg2[%c168, %c0_18] : memref<304x128xf32, #tpu.memory_space<vmem>>, vector<128x128xf32>
    %c296 = arith.constant 296 : index
    %c0_19 = arith.constant 0 : index
    %45 = vector.load %arg2[%c296, %c0_19] : memref<304x128xf32, #tpu.memory_space<vmem>>, vector<1x128xf32>
    %cst_20 = arith.constant dense<0.000000e+00> : vector<8x128xf32>
    %46 = tpu.matmul %43, %44, %cst_20 {dimension_numbers = #tpu.dot_dimension_numbers<[1], [0], [0], [1], [0, 0, 1, 1], [], []>} : vector<8x128xf32>, vector<128x128xf32>, vector<8x128xf32> -> vector<8x128xf32>
    %47 = vector.broadcast %45 : vector<1x128xf32> to vector<8x128xf32>
    %48 = arith.addf %46, %47 : vector<8x128xf32>
    %c0_21 = arith.constant 0 : index
    %c0_22 = arith.constant 0 : index
    %49 = vector.load %arg3[%c0_21, %c0_22] : memref<8x128xf32, #tpu.memory_space<vmem>>, vector<8x128xf32>
    tpu.vector_store %arg3[%c0_21, %c0_22], %48 {strides = array<i32>} : memref<8x128xf32, #tpu.memory_space<vmem>>, vector<8x128xf32>,
    return
  }
  func.func @transform_0(%arg0: i32) -> (i32, i32) {
    %c0_i32 = arith.constant 0 : i32
    %c0_i32_0 = arith.constant 0 : i32
    %c0_i32_1 = arith.constant 0 : i32
    return %c0_i32, %c0_i32_0 : i32, i32
  }
  func.func @transform_1(%arg0: i32) -> (i32, i32) {
    %c0_i32 = arith.constant 0 : i32
    %c0_i32_0 = arith.constant 0 : i32
    %c0_i32_1 = arith.constant 0 : i32
    return %c0_i32, %c0_i32_0 : i32, i32
  }
  func.func @transform_2(%arg0: i32) -> (i32, i32) {
    %c0_i32 = arith.constant 0 : i32
    %c0_i32_0 = arith.constant 0 : i32
    %c0_i32_1 = arith.constant 0 : i32
    return %c0_i32, %c0_i32_0 : i32, i32
  }
}

</mosaic_0001>

<llo_original>
// kernel: forward.1
$region0: #{forward.1}
  #allocation0 [shape = 'u32[]', space=smem, size = 0x4, offset = 0x4, fixed_abs, tag = 'smem constant byte address 0x4 - core index']
  #allocation1 [shape = 'u32[72,128]{1,0:T(1,128)}', space=vmem, size = 0x9000, scoped, tag = 'internal scratch']
  %s0 = inlined_call_operand.hbm [shape: f32[8,32], index: 0, kind: input, shape index: {}]
  %s1 = inlined_call_operand.hbm [shape: f32[304,128], index: 1, kind: input, shape index: {}]
  %s2 = inlined_call_operand.hbm [shape: f32[8,128], index: 2, kind: output, shape index: {}]
  %s3 = sld [smem:[#allocation0]]
  $region26: #{forward.1} parent=0
    _
  %s5 = ssub.s32 1, %s3
  %s6 = scalar_select 0, %s5, %s3
  $region1: #{forward.1} parent=0
    #allocation2 [shape = 'u8[4096]{0}', space=vmem, size = 0x1000, scoped, tag = 'input window, operand 0, single buffered']
    #allocation3 [shape = 's32[1]{0}', space=sflag, size = 0x4, scoped, tag = 'scoped memory for forward.1']
    #allocation4 [shape = 's32[1]{0}', space=sflag, size = 0x4, scoped, tag = 'scoped memory for forward.1']
    #allocation5 [shape = 'u8[155648]{0}', space=vmem, size = 0x26000, scoped, tag = 'input window, operand 1, single buffered']
    #allocation6 [shape = 's32[1]{0}', space=sflag, size = 0x4, scoped, tag = 'scoped memory for forward.1']
    #allocation7 [shape = 'u8[4096]{0}', space=vmem, size = 0x1000, scoped, tag = 'output window, operand 0, single buffered']
    %7 = vsyncpa [#allocation3], 0
    %8 = vsyncpa [#allocation6], 0
    %9 = vsyncpa [#allocation4], 0
    // Predicated region
    $region2: #{forward.1} parent=1 // pred_check
      _
    $region3: #{forward.1} parent=1 // pred_check_branch
      %11 = sbr.rel (0) target = $region5
    $region4: #{forward.1} parent=1 // pred_region
      %13 = vsyncadd [#allocation3], 0
      %s15 = sshll.u32 %s0, 4
      %s16 = int_to_ptr.hbm [resolvable:$true] %s15
      %s17 = sshll.u32 [#allocation2], 4
      %s18 = int_to_ptr.vmem [resolvable:$true] %s17
      %20 = dma.hbm_to_vmem [thread:$0]  %s16, 128, %s18, [#allocation3]
    $region5: #{forward.1} parent=1 // pred_fallthru
      _
    // Predicated region
    $region6: #{forward.1} parent=1 // pred_check
      _
    $region7: #{forward.1} parent=1 // pred_check_branch
      %22 = sbr.rel (0) target = $region9
    $region8: #{forward.1} parent=1 // pred_region
      %24 = vsyncadd [#allocation6], 0
      %s25 = sshll.u32 %s1, 4
      %s26 = int_to_ptr.hbm [resolvable:$true] %s25
      %s27 = sshll.u32 [#allocation5], 4
      %s28 = int_to_ptr.vmem [resolvable:$true] %s27
      %33 = dma.hbm_to_vmem [thread:$0]  %s26, 4864, %s28, [#allocation6], 128, 128, 8
    $region9: #{forward.1} parent=1 // pred_fallthru
      _
    // Predicated region
    $region10: #{forward.1} parent=1 // pred_check
      _
    $region11: #{forward.1} parent=1 // pred_check_branch
      %35 = sbr.rel (0) target = $region13
    $region12: #{forward.1} parent=1 // pred_region
      %37 = dma.done [#allocation3], 128
    $region13: #{forward.1} parent=1 // pred_fallthru
      _
    // Predicated region
    $region14: #{forward.1} parent=1 // pred_check
      _
    $region15: #{forward.1} parent=1 // pred_check_branch
      %39 = sbr.rel (0) target = $region17
    $region16: #{forward.1} parent=1 // pred_region
      %41 = dma.done [#allocation6], 4864
    $region17: #{forward.1} parent=1 // pred_fallthru
      _
    %v42 = vld [vmem:[#allocation2] sm:$0xff]
    %v43 = vld [vmem:[#allocation5] sm:$0xff]
    %v44 = vld [vmem:[#allocation5 + $0x8] sm:$0xff]
    %v45 = vld [vmem:[#allocation5 + $0x10] sm:$0xff]
    %v46 = vld [vmem:[#allocation5 + $0x18] sm:$0xff]
    %vm47 = vcmask 261120
    %v49 = vsel %vm47, %v42, 0
    %51 = vmatpush.msra.mxu0 0.0
    %52 = vmatpush.msra.mxu0 0.0
    %53 = vmatpush.msra.mxu0 0.0
    %54 = vmatpush.msra.mxu0 0.0
    %55 = vmatpush.msra.mxu0 0.0
    %56 = vmatpush.msra.mxu0 0.0
    %57 = vmatpush.msra.mxu0 0.0
    %58 = vmatpush.msra.mxu0 0.0
    %59 = vmatpush.msra.mxu0 0.0
    %60 = vmatpush.msra.mxu0 0.0
    %61 = vmatpush.msra.mxu0 0.0
    %62 = vmatpush.msra.mxu0 0.0
    %63 = vmatpush.msra.mxu0 %v46
    %64 = vmatpush.msra.mxu0 %v45
    %65 = vmatpush.msra.mxu0 %v44
    %66 = vmatpush.msra.mxu0 %v43
    %67 = vmatmul.f32.gmra.mxu0 %v49
    %v68 = vpop.f32.mrf.mxu0
    %v69 = vadd.f32 0.0, %v68
    %70 = vdwg.mxu0
    %v71 = vld [vmem:[#allocation5 + $0xa0] sm:$0x1]
    %v72 = vld [vmem:[#allocation5 + $0xa2] sm:$0x1]
    %vm73 = vcmask 64512
    %v75 = vsel %vm73, 0.125, 0
    %77 = vmatpush.msra.mxu0 0.0
    %78 = vmatpush.msra.mxu0 0.0
    %79 = vmatpush.msra.mxu0 0.0
    %80 = vmatpush.msra.mxu0 0.0
    %81 = vmatpush.msra.mxu0 0.0
    %82 = vmatpush.msra.mxu0 0.0
    %83 = vmatpush.msra.mxu0 0.0
    %84 = vmatpush.msra.mxu0 0.0
    %85 = vmatpush.msra.mxu0 0.0
    %86 = vmatpush.msra.mxu0 0.0
    %87 = vmatpush.msra.mxu0 0.0
    %88 = vmatpush.msra.mxu0 0.0
    %89 = vmatpush.msra.mxu0 0.0
    %90 = vmatpush.msra.mxu0 0.0
    %91 = vmatpush.msra.mxu0 0.0
    %92 = vmatpush.msra.mxu0 %v69
    %93 = vmatmul.f32.gmra.mxu0 %v75
    %v94 = vpop.f32.mrf.mxu0
    %v95 = vadd.f32 0.0, %v94
    %96 = vdwg.mxu0
    %v97 = vperm.slane %v95, 0
    %v98 = vsub.f32 %v69, %v97
    %v99 = vmul.f32 %v98, %v98
    %100 = vmatpush.msra.mxu0 0.0
    %101 = vmatpush.msra.mxu0 0.0
    %102 = vmatpush.msra.mxu0 0.0
    %103 = vmatpush.msra.mxu0 0.0
    %104 = vmatpush.msra.mxu0 0.0
    %105 = vmatpush.msra.mxu0 0.0
    %106 = vmatpush.msra.mxu0 0.0
    %107 = vmatpush.msra.mxu0 0.0
    %108 = vmatpush.msra.mxu0 0.0
    %109 = vmatpush.msra.mxu0 0.0
    %110 = vmatpush.msra.mxu0 0.0
    %111 = vmatpush.msra.mxu0 0.0
    %112 = vmatpush.msra.mxu0 0.0
    %113 = vmatpush.msra.mxu0 0.0
    %114 = vmatpush.msra.mxu0 0.0
    %115 = vmatpush.msra.mxu0 %v99
    %116 = vmatmul.f32.gmra.mxu0 %v75
    %v117 = vpop.f32.mrf.mxu0
    %v118 = vadd.f32 1e-05, %v117
    %119 = vdwg.mxu0
    %v120 = vrsqrt.pop %v118
    %v121 = vmul.f32 %v120, %v118
    %v122 = vmul.f32 %v121, %v120
    %v123 = vmul.f32 0.5, %v122
    %v124 = vsub.f32 1.5, %v123
    %v125 = vmul.f32 %v120, %v124
    %vm126 = vweird.f32 %v118
    %vm127 = vweird.f32 %v120
    %vm128 = vmor %vm126, %vm127
    %v129 = vsel %vm128, %v120, %v125
    %v130 = vmul.f32 %v71, %v129
    %v131 = vmul.f32 %v95, %v130
    %v132 = vsub.f32 %v72, %v131
    %v133 = vperm.slane %v130, 0
    %v134 = vmul.f32 %v69, %v133
    %v135 = vperm.slane %v132, 0
    %v136 = vadd.f32 %v134, %v135
    %v137 = vmax.f32 %v136, 0.0
    %v138 = vld [vmem:[#allocation5 + $0x20] sm:$0xff]
    %v139 = vld [vmem:[#allocation5 + $0x28] sm:$0xff]
    %v140 = vld [vmem:[#allocation5 + $0x30] sm:$0xff]
    %v141 = vld [vmem:[#allocation5 + $0x38] sm:$0xff]
    %v142 = vld [vmem:[#allocation5 + $0x40] sm:$0xff]
    %v143 = vld [vmem:[#allocation5 + $0x48] sm:$0xff]
    %v144 = vld [vmem:[#allocation5 + $0x50] sm:$0xff]
    %v145 = vld [vmem:[#allocation5 + $0x58] sm:$0xff]
    %v146 = vld [vmem:[#allocation5 + $0x60] sm:$0xff]
    %v147 = vld [vmem:[#allocation5 + $0x68] sm:$0xff]
    %v148 = vld [vmem:[#allocation5 + $0x70] sm:$0xff]
    %v149 = vld [vmem:[#allocation5 + $0x78] sm:$0xff]
    %v150 = vld [vmem:[#allocation5 + $0x80] sm:$0xff]
    %v151 = vld [vmem:[#allocation5 + $0x88] sm:$0xff]
    %v152 = vld [vmem:[#allocation5 + $0x90] sm:$0xff]
    %v153 = vld [vmem:[#allocation5 + $0x98] sm:$0xff]
    %154 = vmatpush.msra.mxu0 %v153
    %155 = vmatpush.msra.mxu0 %v152
    %156 = vmatpush.msra.mxu0 %v151
    %157 = vmatpush.msra.mxu0 %v150
    %158 = vmatpush.msra.mxu0 %v149
    %159 = vmatpush.msra.mxu0 %v148
    %160 = vmatpush.msra.mxu0 %v147
    %161 = vmatpush.msra.mxu0 %v146
    %162 = vmatpush.msra.mxu0 %v145
    %163 = vmatpush.msra.mxu0 %v144
    %164 = vmatpush.msra.mxu0 %v143
    %165 = vmatpush.msra.mxu0 %v142
    %166 = vmatpush.msra.mxu0 %v141
    %167 = vmatpush.msra.mxu0 %v140
    %168 = vmatpush.msra.mxu0 %v139
    %169 = vmatpush.msra.mxu0 %v138
    %170 = vmatmul.f32.gmra.mxu0 %v137
    %v171 = vpop.f32.mrf.mxu0
    %v172 = vadd.f32 0.0, %v171
    %173 = vdwg.mxu0
    %v174 = vld [vmem:[#allocation5 + $0xa1] sm:$0x1]
    %v175 = vld [vmem:[#allocation5 + $0xa3] sm:$0x1]
    %176 = vmatpush.msra.mxu0 0.0
    %177 = vmatpush.msra.mxu0 0.0
    %178 = vmatpush.msra.mxu0 0.0
    %179 = vmatpush.msra.mxu0 0.0
    %180 = vmatpush.msra.mxu0 0.0
    %181 = vmatpush.msra.mxu0 0.0
    %182 = vmatpush.msra.mxu0 0.0
    %183 = vmatpush.msra.mxu0 0.0
    %184 = vmatpush.msra.mxu0 0.0
    %185 = vmatpush.msra.mxu0 0.0
    %186 = vmatpush.msra.mxu0 0.0
    %187 = vmatpush.msra.mxu0 0.0
    %188 = vmatpush.msra.mxu0 0.0
    %189 = vmatpush.msra.mxu0 0.0
    %190 = vmatpush.msra.mxu0 0.0
    %191 = vmatpush.msra.mxu0 %v172
    %192 = vmatmul.f32.gmra.mxu0 %v75
    %v193 = vpop.f32.mrf.mxu0
    %v194 = vadd.f32 0.0, %v193
    %195 = vdwg.mxu0
    %v196 = vperm.slane %v194, 0
    %v197 = vsub.f32 %v172, %v196
    %v198 = vmul.f32 %v197, %v197
    %199 = vmatpush.msra.mxu0 0.0
    %200 = vmatpush.msra.mxu0 0.0
    %201 = vmatpush.msra.mxu0 0.0
    %202 = vmatpush.msra.mxu0 0.0
    %203 = vmatpush.msra.mxu0 0.0
    %204 = vmatpush.msra.mxu0 0.0
    %205 = vmatpush.msra.mxu0 0.0
    %206 = vmatpush.msra.mxu0 0.0
    %207 = vmatpush.msra.mxu0 0.0
    %208 = vmatpush.msra.mxu0 0.0
    %209 = vmatpush.msra.mxu0 0.0
    %210 = vmatpush.msra.mxu0 0.0
    %211 = vmatpush.msra.mxu0 0.0
    %212 = vmatpush.msra.mxu0 0.0
    %213 = vmatpush.msra.mxu0 0.0
    %214 = vmatpush.msra.mxu0 %v198
    %215 = vmatmul.f32.gmra.mxu0 %v75
    %v216 = vpop.f32.mrf.mxu0
    %v217 = vadd.f32 1e-05, %v216
    %218 = vdwg.mxu0
    %v219 = vrsqrt.pop %v217
    %v220 = vmul.f32 %v219, %v217
    %v221 = vmul.f32 %v220, %v219
    %v222 = vmul.f32 0.5, %v221
    %v223 = vsub.f32 1.5, %v222
    %v224 = vmul.f32 %v219, %v223
    %vm225 = vweird.f32 %v217
    %vm226 = vweird.f32 %v219
    %vm227 = vmor %vm225, %vm226
    %v228 = vsel %vm227, %v219, %v224
    %v229 = vmul.f32 %v174, %v228
    %v230 = vmul.f32 %v194, %v229
    %v231 = vsub.f32 %v175, %v230
    %v232 = vperm.slane %v229, 0
    %v233 = vmul.f32 %v172, %v232
    %v234 = vperm.slane %v231, 0
    %v235 = vadd.f32 %v233, %v234
    %v236 = vmax.f32 %v235, 0.0
    %v237 = vld [vmem:[#allocation5 + $0xa8] sm:$0xff]
    %v238 = vld [vmem:[#allocation5 + $0xb0] sm:$0xff]
    %v239 = vld [vmem:[#allocation5 + $0xb8] sm:$0xff]
    %v240 = vld [vmem:[#allocation5 + $0xc0] sm:$0xff]
    %v241 = vld [vmem:[#allocation5 + $0xc8] sm:$0xff]
    %v242 = vld [vmem:[#allocation5 + $0xd0] sm:$0xff]
    %v243 = vld [vmem:[#allocation5 + $0xd8] sm:$0xff]
    %v244 = vld [vmem:[#allocation5 + $0xe0] sm:$0xff]
    %v245 = vld [vmem:[#allocation5 + $0xe8] sm:$0xff]
    %v246 = vld [vmem:[#allocation5 + $0xf0] sm:$0xff]
    %v247 = vld [vmem:[#allocation5 + $0xf8] sm:$0xff]
    %v248 = vld [vmem:[#allocation5 + $0x100] sm:$0xff]
    %v249 = vld [vmem:[#allocation5 + $0x108] sm:$0xff]
    %v250 = vld [vmem:[#allocation5 + $0x110] sm:$0xff]
    %v251 = vld [vmem:[#allocation5 + $0x118] sm:$0xff]
    %v252 = vld [vmem:[#allocation5 + $0x120] sm:$0xff]
    %v253 = vld [vmem:[#allocation5 + $0x128] sm:$0x1]
    %v254 = vperm.slane %v253, 0
    %255 = vmatpush.msra.mxu0 %v252
    %256 = vmatpush.msra.mxu0 %v251
    %257 = vmatpush.msra.mxu0 %v250
    %258 = vmatpush.msra.mxu0 %v249
    %259 = vmatpush.msra.mxu0 %v248
    %260 = vmatpush.msra.mxu0 %v247
    %261 = vmatpush.msra.mxu0 %v246
    %262 = vmatpush.msra.mxu0 %v245
    %263 = vmatpush.msra.mxu0 %v244
    %264 = vmatpush.msra.mxu0 %v243
    %265 = vmatpush.msra.mxu0 %v242
    %266 = vmatpush.msra.mxu0 %v241
    %267 = vmatpush.msra.mxu0 %v240
    %268 = vmatpush.msra.mxu0 %v239
    %269 = vmatpush.msra.mxu0 %v238
    %270 = vmatpush.msra.mxu0 %v237
    %271 = vmatmul.f32.gmra.mxu0 %v236
    %v272 = vpop.f32.mrf.mxu0
    %v273 = vadd.f32 %v254, %v272
    %274 = vdwg.mxu0
    %275 = vst [vmem:[#allocation7] sm:$0xff] %v273
    // Predicated region
    $region18: #{forward.1} parent=1 // pred_check
      _
    $region19: #{forward.1} parent=1 // pred_check_branch
      %277 = sbr.rel (0) target = $region21
    $region20: #{forward.1} parent=1 // pred_region
      %279 = vsyncadd [#allocation4], 0
      %s281 = sshll.u32 [#allocation7], 4
      %s282 = int_to_ptr.vmem [resolvable:$true] %s281
      %s283 = sshll.u32 %s2, 4
      %s284 = int_to_ptr.hbm [resolvable:$true] %s283
      %286 = dma.vmem_to_hbm [thread:$0]  %s282, 128, %s284, [#allocation4]
    $region21: #{forward.1} parent=1 // pred_fallthru
      _
    // Predicated region
    $region22: #{forward.1} parent=1 // pred_check
      _
    $region23: #{forward.1} parent=1 // pred_check_branch
      %288 = sbr.rel (0) target = $region25
    $region24: #{forward.1} parent=1 // pred_region
      %290 = dma.done [#allocation4], 128
    $region25: #{forward.1} parent=1 // pred_fallthru
      _
    %291 = vsyncpa [#allocation3], 1
    %292 = vsyncpa [#allocation6], 1
    %293 = vsyncpa [#allocation4], 1

</llo_original>
